<compile_context>
chip_gen: v5e
topology: v5e:2x2
jax: 0.10.0
libtpu: 0.0.40
codegen_flags: <defaults>
</compile_context>

<pallas_src>
import functools

import numpy as np
import jax
import jax.numpy as jnp
from jax import lax
from jax.experimental import pallas as pl
from jax.experimental.pallas import tpu as pltpu

HIDDEN = 1000       # logical autoencoder width (hardcoded in the PyTorch module)
HIDDEN_PAD = 1024   # lane-dense padded width used inside the kernels

# bf16 weights run the MXU at its native bf16 rate on v5e/v6e/v7x and halve
# resident / streamed weight bytes; accumulation stays f32 via
# preferred_element_type.  Set to jnp.float32 for exact-f32 PyTorch parity.
WEIGHTS_DTYPE = jnp.bfloat16


def _round_up(x, m):
    return ((x + m - 1) // m) * m


# --------------------------------------------------------------------------
# Kernel 1: single-layer tanh RNN scan, streamed over T in chunks.
#   * grid over T-chunks ("arbitrary"); h carried across chunks via VMEM
#     scratch, so VMEM residency is O(chunk) not O(T).
#   * per-chunk prologue computes the input projection (independent steps,
#     pipelined on the MXU); the serial scan body then has a single dot
#     (h @ W_hh) on the carry critical path.
# --------------------------------------------------------------------------
def _rnn_scan_kernel(x_ref, wih_ref, whh_ref, b_ref,
                     h_all_ref, hcarry_ref, xproj_ref):
    ct, B, F = x_ref.shape
    wih = wih_ref[...]
    whh = whh_ref[...]
    b_b = jnp.broadcast_to(b_ref[...], (B, F))      # hoisted (no per-step bcast)

    @pl.when(pl.program_id(0) == 0)
    def _():
        hcarry_ref[...] = jnp.zeros_like(hcarry_ref)   # h0 = 0

    # Prologue: input projection for the whole chunk (off the carry path).
    def proj_body(t, carry):
        xproj_ref[t] = (jnp.dot(x_ref[t].astype(wih.dtype), wih,
                                preferred_element_type=jnp.float32) + b_b)
        return carry
    lax.fori_loop(0, ct, proj_body, 0, unroll=(True if ct <= 16 else 8))

    # Serial scan: only the recurrent dot sits on the carry critical path.
    def scan_body(t, h):
        h_new = jnp.tanh(
            xproj_ref[t]
            + jnp.dot(h.astype(whh.dtype), whh, preferred_element_type=jnp.float32))
        h_all_ref[t] = h_new
        return h_new
    hcarry_ref[...] = lax.fori_loop(0, ct, scan_body, hcarry_ref[...],
                                    unroll=(True if ct <= 16 else 4))


def rnn_forward(x_tm, w_ih_t, w_hh_t, b_rnn, chunk_t=256):
    """x_tm: (T, B, F) time-major f32.  Returns all hidden states (T, B, F) f32."""
    T, B, F = x_tm.shape
    ct = min(chunk_t, T)
    T_pad = _round_up(T, ct)
    if T_pad != T:
        # zero-padded trailing steps only produce unused (discarded) rows
        x_tm = jnp.pad(x_tm, ((0, T_pad - T), (0, 0), (0, 0)))
    n_chunks = T_pad // ct

    h_out = pl.pallas_call(
        _rnn_scan_kernel,
        out_shape=jax.ShapeDtypeStruct((T_pad, B, F), jnp.float32),
        grid=(n_chunks,),
        in_specs=[
            pl.BlockSpec((ct, B, F), lambda c: (c, 0, 0)),   # x chunk
            pl.BlockSpec((F, F), lambda c: (0, 0)),          # W_ih^T
            pl.BlockSpec((F, F), lambda c: (0, 0)),          # W_hh^T
            pl.BlockSpec((1, F), lambda c: (0, 0)),          # b_ih + b_hh
        ],
        out_specs=pl.BlockSpec((ct, B, F), lambda c: (c, 0, 0)),
        scratch_shapes=[
            pltpu.VMEM((B, F), jnp.float32),      # h carry across chunks
            pltpu.VMEM((ct, B, F), jnp.float32),  # per-chunk input projection
        ],
        compiler_params=pltpu.CompilerParams(
            dimension_semantics=("arbitrary",),   # sequential carry over chunks
        ),
    )(x_tm, w_ih_t, w_hh_t, b_rnn)
    return h_out[:T]


# --------------------------------------------------------------------------
# Kernel 2: autoencoder MLP over all B*T rows, row-tiled, with per-tile
# teacher-forced SSE partials (so the row grid can run "parallel" across
# both v7x TensorCores; the n_tiles-element reduction happens in the wrapper).
# TODO(synk): Dropout(p=0.5) layers are treated as identity (eval-mode
#             semantics); no stochastic dropout is applied.
# --------------------------------------------------------------------------
def _autoenc_kernel(h_ref, tgt_ref, mask_ref,
                    w1_ref, b1_ref, w2_ref, b2_ref, w3_ref, b3_ref,
                    y_ref, sse_ref):
    w1, w2, w3 = w1_ref[...], w2_ref[...], w3_ref[...]
    z = jnp.dot(h_ref[...].astype(w1.dtype), w1,
                preferred_element_type=jnp.float32) + b1_ref[...]
    z = jnp.maximum(z, 0.0)
    # feed the MXU bf16 activations (halves VMEM staging of the (tile,1024) z)
    z = jnp.dot(z.astype(w2.dtype), w2,
                preferred_element_type=jnp.float32) + b2_ref[...]
    z = jnp.maximum(z, 0.0)
    y = jnp.dot(z.astype(w3.dtype), w3,
                preferred_element_type=jnp.float32) + b3_ref[...]
    y_ref[...] = y

    # fused teacher-forced SSE partial; padded / last-timestep rows have mask 0.
    d = (y - tgt_ref[...]) * mask_ref[...]
    sse_ref[0] = jnp.sum(d * d, keepdims=True)        # (1, 1) partial for this tile


def autoenc_forward(h_pad, tgt_pad, mask, p, row_tile):
    N_pad, F = h_pad.shape
    H = p["w1"].shape[1]            # HIDDEN_PAD
    n_tiles = N_pad // row_tile
    const = lambda s: pl.BlockSpec(s, lambda i: (0, 0))
    return pl.pallas_call(
        _autoenc_kernel,
        out_shape=(jax.ShapeDtypeStruct((N_pad, F), jnp.float32),
                   jax.ShapeDtypeStruct((n_tiles, 1, 1), jnp.float32)),
        grid=(n_tiles,),
        in_specs=[
            pl.BlockSpec((row_tile, F), lambda i: (i, 0)),   # hidden-state rows
            pl.BlockSpec((row_tile, F), lambda i: (i, 0)),   # teacher targets
            pl.BlockSpec((row_tile, 1), lambda i: (i, 0)),   # row validity mask
            const((F, H)), const((1, H)),                    # W1^T, b1
            const((H, H)), const((1, H)),                    # W2^T, b2
            const((H, F)), const((1, F)),                    # W3^T, b3
        ],
        out_specs=(pl.BlockSpec((row_tile, F), lambda i: (i, 0)),
                   pl.BlockSpec((1, 1, 1), lambda i: (i, 0, 0))),
        # Every grid step writes disjoint y / SSE blocks -> safe to shard the
        # row grid across TensorCores (v7x megacore).
        compiler_params=pltpu.CompilerParams(
            dimension_semantics=("parallel",),
        ),
    )(h_pad, tgt_pad, mask, p["w1"], p["b1"], p["w2"], p["b2"], p["w3"], p["b3"])


# --------------------------------------------------------------------------
# Kernel 3: autoregressive forecast — one pallas_call, fori_loop over
# max_gap; per-sample gap select and final-step SSE fused in-kernel.
# --------------------------------------------------------------------------
def _forecast_kernel(xhat0_ref, hhat0_ref, gapidx_ref, xfinal_ref,
                     wih_ref, whh_ref, brnn_ref,
                     w1_ref, b1_ref, w2_ref, b2_ref, w3_ref, b3_ref,
                     xpred_ref, sse_ref, *, max_gap):
    B, F = xhat0_ref.shape
    wih, whh = wih_ref[...], whh_ref[...]
    w1, w2, w3 = w1_ref[...], w2_ref[...], w3_ref[...]
    H = w1.shape[1]
    # hoisted bias broadcasts (JAX does not CSE broadcast_in_dim per iteration)
    brnn_b = jnp.broadcast_to(brnn_ref[...], (B, F))
    b1_b = jnp.broadcast_to(b1_ref[...], (B, H))
    b2_b = jnp.broadcast_to(b2_ref[...], (B, H))
    b3_b = jnp.broadcast_to(b3_ref[...], (B, F))
    gap_idx = gapidx_ref[...]                       # (B, 1) int32 == gap - 1

    def body(g, carry):
        x_hat, h_hat, x_pred = carry
        h_new = jnp.tanh(
            jnp.dot(x_hat.astype(wih.dtype), wih, preferred_element_type=jnp.float32)
            + jnp.dot(h_hat.astype(whh.dtype), whh, preferred_element_type=jnp.float32)
            + brnn_b)
        z = jnp.maximum(jnp.dot(h_new.astype(w1.dtype), w1,
                                preferred_element_type=jnp.float32) + b1_b, 0.0)
        z = jnp.maximum(jnp.dot(z.astype(w2.dtype), w2,
                                preferred_element_type=jnp.float32) + b2_b, 0.0)
        x_new = jnp.dot(z.astype(w3.dtype), w3,
                        preferred_element_type=jnp.float32) + b3_b
        x_pred = jnp.where(gap_idx == g, x_new, x_pred)   # per-sample gap select
        return x_new, h_new, x_pred

    x0 = xhat0_ref[...]
    # full unroll for short horizons, partial unroll otherwise so the
    # scheduler can overlap adjacent steps' weight streaming / selects.
    _, _, x_pred = lax.fori_loop(
        0, max_gap, body, (x0, hhat0_ref[...], jnp.zeros_like(x0)),
        unroll=(True if max_gap <= 16 else 4))

    xpred_ref[...] = x_pred
    d = x_pred - xfinal_ref[...]
    sse_ref[...] = jnp.sum(d * d, keepdims=True)


def forecast_loop(x_hat0, h_hat0, gap_idx, x_final, p, max_gap):
    """Returns (x_pred (B,F), sse2 (1,1))."""
    B, F = x_hat0.shape
    kern = functools.partial(_forecast_kernel, max_gap=max_gap)
    return pl.pallas_call(
        kern,
        out_shape=(jax.ShapeDtypeStruct((B, F), jnp.float32),
                   jax.ShapeDtypeStruct((1, 1), jnp.float32)),
    )(x_hat0, h_hat0, gap_idx, x_final,
      p["w_ih_t"], p["w_hh_t"], p["b_rnn"],
      p["w1"], p["b1"], p["w2"], p["b2"], p["w3"], p["b3"])


# --------------------------------------------------------------------------
# Full forward pass (glue in plain JAX, hot paths in Pallas)
# --------------------------------------------------------------------------
def forecast_rnn_no_bn_forward(x, t_gap, params):
    """x: (B, S, F) float32;  t_gap: (B,) integer gaps (>= 1).

    Returns (x_pred, lossval, y) matching the PyTorch module's forward.
    NOTE: t_gap must be concrete at trace time — the forecast trip count is
    int(t_gap.max()), mirroring the PyTorch `int(gap.max())` Python loop.
    """
    x = jnp.asarray(x, jnp.float32)
    x_final = x[:, -1, :]                       # (B, F)
    x_in = x[:, :-1, :]                         # (B, T, F)
    B, T, F = x_in.shape

    # --- RNN over the observed sequence (time-major; h0 = zeros) -----------
    x_tm = jnp.transpose(x_in, (1, 0, 2))       # single layout transform
    h_tm = rnn_forward(x_tm, params["w_ih_t"], params["w_hh_t"], params["b_rnn"])

    # --- autoencoder on all hidden states + fused teacher-forced SSE -------
    N = T * B
    # 256-row tiles keep the v6e/v7x 256-wide MXU full; v5e saturates at 128.
    row_tile = min(256, _round_up(N, 8))
    N_pad = _round_up(N, row_tile)
    h_flat = h_tm.reshape(N, F)                 # time-major flatten: free reshape
    h_pad = jnp.pad(h_flat, ((0, N_pad - N), (0, 0)))
    n_valid = (T - 1) * B                       # rows that have a teacher target
    tgt = x_tm[1:].reshape(n_valid, F)          # target for row (t,b) is x_tm[t+1,b]
    tgt_pad = jnp.pad(tgt, ((0, N_pad - n_valid), (0, 0)))
    mask = (jnp.arange(N_pad) < n_valid).astype(jnp.float32)[:, None]

    y_pad, sse1_part = autoenc_forward(h_pad, tgt_pad, mask, params, row_tile)
    y_tm = y_pad[:N].reshape(T, B, F)
    y = jnp.transpose(y_tm, (1, 0, 2))          # module API returns batch-first y

    # module.loss == MSELoss(reduction='mean') / nelement == SSE / nelement^2
    if T != 1:
        nelt1 = jnp.float32(n_valid * F)
        lossval = jnp.sum(sse1_part) / (nelt1 * nelt1)
    else:
        lossval = jnp.float32(0.0)

    # --- autoregressive forecast: in-kernel gap select + fused final SSE ----
    gap = np.asarray(t_gap).reshape(-1)
    max_gap = int(gap.max())                    # host value (mirrors int(gap.max()))
    gap_idx = jnp.asarray(gap - 1, jnp.int32).reshape(B, 1)
    x_pred, sse2 = forecast_loop(y_tm[-1], h_tm[-1], gap_idx, x_final,
                                 params, max_gap)

    nelt2 = jnp.float32(B * F)
    lossval = lossval + sse2[0, 0] / (nelt2 * nelt2)
    return x_pred, lossval, y


# --------------------------------------------------------------------------
# Deterministic parameter init (PyTorch-style uniform(-1/sqrt(fan_in), ...))
# Hidden dim is zero-padded 1000 -> 1024 once here (numerically inert), then
# the matmul weights are cast to WEIGHTS_DTYPE (bf16 by default) for the MXU.
# --------------------------------------------------------------------------
def init_params(key, F, weights_dtype=WEIGHTS_DTYPE):
    ks = jax.random.split(key, 10)

    def unif(k, shape, fan_in):
        bound = 1.0 / np.sqrt(fan_in)
        return jax.random.uniform(k, shape, jnp.float32, -bound, bound)

    p = {
        # RNN: weights stored (in, out); biases combined (b_ih + b_hh)
        "w_ih_t": unif(ks[0], (F, F), F),
        "w_hh_t": unif(ks[1], (F, F), F),
        "b_rnn": unif(ks[2], (1, F), F) + unif(ks[3], (1, F), F),
        # autoenc: Linear(F,1000), Linear(1000,1000), Linear(1000,F)
        "w1": unif(ks[4], (F, HIDDEN), F),
        "b1": unif(ks[5], (1, HIDDEN), F),
        "w2": unif(ks[6], (HIDDEN, HIDDEN), HIDDEN),
        "b2": unif(ks[7], (1, HIDDEN), HIDDEN),
        "w3": unif(ks[8], (HIDDEN, F), HIDDEN),
        "b3": unif(ks[9], (1, F), HIDDEN),
    }
    ph = HIDDEN_PAD - HIDDEN
    p["w1"] = jnp.pad(p["w1"], ((0, 0), (0, ph)))
    p["b1"] = jnp.pad(p["b1"], ((0, 0), (0, ph)))
    p["w2"] = jnp.pad(p["w2"], ((0, ph), (0, ph)))
    p["b2"] = jnp.pad(p["b2"], ((0, 0), (0, ph)))
    p["w3"] = jnp.pad(p["w3"], ((0, ph), (0, 0)))
    # MXU operands in bf16 (f32 accumulation via preferred_element_type);
    # biases stay f32.  Use weights_dtype=jnp.float32 for exact parity.
    for name in ("w_ih_t", "w_hh_t", "w1", "w2", "w3"):
        p[name] = p[name].astype(weights_dtype)
    return p


if __name__ == "__main__":
    key = jax.random.PRNGKey(0)
    kx, kp = jax.random.split(key, 2)

    B, S, F = 2, 8, 32              # batch, sequence (incl. final target step), features
    x = jax.random.normal(kx, (B, S, F), jnp.float32)
    t_gap = jnp.array([3, 5], jnp.int32)   # per-sample forecast gaps (>= 1)

    params = init_params(kp, F)

    x_pred, lossval, y = forecast_rnn_no_bn_forward(x, t_gap, params)
    jax.block_until_ready((x_pred, lossval, y))

    assert x_pred.shape == (B, F)
    assert y.shape == (B, S - 1, F)
    assert lossval.shape == ()
    assert bool(jnp.isfinite(lossval))
    print("KERNEL_OK")
</pallas_src>

<mosaic_0001>
module attributes {stable_mosaic.version = 11 : i64} {
  func.func @_rnn_scan_kernel(%arg0: i32, %arg1: memref<7x2x32xf32, #tpu.memory_space<vmem>>, %arg2: memref<32x32xbf16, #tpu.memory_space<vmem>>, %arg3: memref<32x32xbf16, #tpu.memory_space<vmem>>, %arg4: memref<1x32xf32, #tpu.memory_space<vmem>>, %arg5: memref<7x2x32xf32, #tpu.memory_space<vmem>>, %arg6: memref<2x32xf32, #tpu.memory_space<vmem>>, %arg7: memref<7x2x32xf32, #tpu.memory_space<vmem>>) attributes {dimension_semantics = [#tpu.dimension_semantics<arbitrary>], iteration_bounds = array<i64: 1>, scalar_prefetch = 0 : i64, scratch_operands = 2 : i64, tpu.core_type = #tpu.core_type<tc>, window_params = [{transform_indices = @transform_0, window_bounds = array<i64: 7, 2, 32>}, {pipeline_mode = #tpu.pipeline_mode<synchronous>, transform_indices = @transform_1, window_bounds = array<i64: 32, 32>}, {pipeline_mode = #tpu.pipeline_mode<synchronous>, transform_indices = @transform_2, window_bounds = array<i64: 32, 32>}, {pipeline_mode = #tpu.pipeline_mode<synchronous>, transform_indices = @transform_3, window_bounds = array<i64: 1, 32>}, {transform_indices = @transform_4, window_bounds = array<i64: 7, 2, 32>}]} {
    %c0 = arith.constant 0 : index
    %c0_0 = arith.constant 0 : index
    %0 = vector.load %arg2[%c0, %c0_0] : memref<32x32xbf16, #tpu.memory_space<vmem>>, vector<32x32xbf16>
    %c0_1 = arith.constant 0 : index
    %c0_2 = arith.constant 0 : index
    %1 = vector.load %arg3[%c0_1, %c0_2] : memref<32x32xbf16, #tpu.memory_space<vmem>>, vector<32x32xbf16>
    %c0_3 = arith.constant 0 : index
    %c0_4 = arith.constant 0 : index
    %2 = vector.load %arg4[%c0_3, %c0_4] : memref<1x32xf32, #tpu.memory_space<vmem>>, vector<1x32xf32>
    %3 = vector.shape_cast %2 : vector<1x32xf32> to vector<1x32xf32>
    %4 = vector.broadcast %3 : vector<1x32xf32> to vector<2x32xf32>
    %c0_i32 = arith.constant 0 : i32
    %5 = arith.cmpi eq, %arg0, %c0_i32 : i32
    %6 = arith.extui %5 : i1 to i32
    %c0_i32_5 = arith.constant 0 : i32
    %7 = arith.cmpi ne, %6, %c0_i32_5 : i32
    scf.if %7 {
      %cst_88 = arith.constant 0.000000e+00 : f32
      %157 = vector.broadcast %cst_88 : f32 to vector<2x32xf32>
      %c0_89 = arith.constant 0 : index
      %c0_90 = arith.constant 0 : index
      %158 = vector.load %arg6[%c0_89, %c0_90] : memref<2x32xf32, #tpu.memory_space<vmem>>, vector<2x32xf32>
      tpu.vector_store %arg6[%c0_89, %c0_90], %157 {strides = array<i32>} : memref<2x32xf32, #tpu.memory_space<vmem>>, vector<2x32xf32>,
    } else {
    }
    %c0_i32_6 = arith.constant 0 : i32
    %8 = arith.index_cast %c0_i32_6 : i32 to index
    %c0_7 = arith.constant 0 : index
    %c0_8 = arith.constant 0 : index
    %9 = vector.load %arg1[%8, %c0_7, %c0_8] : memref<7x2x32xf32, #tpu.memory_space<vmem>>, vector<1x2x32xf32>
    %10 = vector.shape_cast %9 : vector<1x2x32xf32> to vector<2x32xf32>
    %11 = arith.truncf %10 : vector<2x32xf32> to vector<2x32xbf16>
    %cst = arith.constant dense<0.000000e+00> : vector<2x32xf32>
    %12 = tpu.matmul %11, %0, %cst {dimension_numbers = #tpu.dot_dimension_numbers<[1], [0], [0], [1], [0, 0, 1, 1], [], []>} : vector<2x32xbf16>, vector<32x32xbf16>, vector<2x32xf32> -> vector<2x32xf32>
    %13 = arith.addf %12, %4 : vector<2x32xf32>
    %14 = arith.index_cast %c0_i32_6 : i32 to index
    %c0_9 = arith.constant 0 : index
    %c0_10 = arith.constant 0 : index
    %15 = vector.load %arg7[%14, %c0_9, %c0_10] : memref<7x2x32xf32, #tpu.memory_space<vmem>>, vector<1x2x32xf32>
    %16 = vector.shape_cast %15 : vector<1x2x32xf32> to vector<2x32xf32>
    %17 = vector.shape_cast %13 : vector<2x32xf32> to vector<1x2x32xf32>
    tpu.vector_store %arg7[%14, %c0_9, %c0_10], %17 {strides = array<i32>} : memref<7x2x32xf32, #tpu.memory_space<vmem>>, vector<1x2x32xf32>,
    %c1_i32 = arith.constant 1 : i32
    %18 = arith.index_cast %c1_i32 : i32 to index
    %c0_11 = arith.constant 0 : index
    %c0_12 = arith.constant 0 : index
    %19 = vector.load %arg1[%18, %c0_11, %c0_12] : memref<7x2x32xf32, #tpu.memory_space<vmem>>, vector<1x2x32xf32>
    %20 = vector.shape_cast %19 : vector<1x2x32xf32> to vector<2x32xf32>
    %21 = arith.truncf %20 : vector<2x32xf32> to vector<2x32xbf16>
    %cst_13 = arith.constant dense<0.000000e+00> : vector<2x32xf32>
    %22 = tpu.matmul %21, %0, %cst_13 {dimension_numbers = #tpu.dot_dimension_numbers<[1], [0], [0], [1], [0, 0, 1, 1], [], []>} : vector<2x32xbf16>, vector<32x32xbf16>, vector<2x32xf32> -> vector<2x32xf32>
    %23 = arith.addf %22, %4 : vector<2x32xf32>
    %24 = arith.index_cast %c1_i32 : i32 to index
    %c0_14 = arith.constant 0 : index
    %c0_15 = arith.constant 0 : index
    %25 = vector.load %arg7[%24, %c0_14, %c0_15] : memref<7x2x32xf32, #tpu.memory_space<vmem>>, vector<1x2x32xf32>
    %26 = vector.shape_cast %25 : vector<1x2x32xf32> to vector<2x32xf32>
    %27 = vector.shape_cast %23 : vector<2x32xf32> to vector<1x2x32xf32>
    tpu.vector_store %arg7[%24, %c0_14, %c0_15], %27 {strides = array<i32>} : memref<7x2x32xf32, #tpu.memory_space<vmem>>, vector<1x2x32xf32>,
    %c2_i32 = arith.constant 2 : i32
    %28 = arith.index_cast %c2_i32 : i32 to index
    %c0_16 = arith.constant 0 : index
    %c0_17 = arith.constant 0 : index
    %29 = vector.load %arg1[%28, %c0_16, %c0_17] : memref<7x2x32xf32, #tpu.memory_space<vmem>>, vector<1x2x32xf32>
    %30 = vector.shape_cast %29 : vector<1x2x32xf32> to vector<2x32xf32>
    %31 = arith.truncf %30 : vector<2x32xf32> to vector<2x32xbf16>
    %cst_18 = arith.constant dense<0.000000e+00> : vector<2x32xf32>
    %32 = tpu.matmul %31, %0, %cst_18 {dimension_numbers = #tpu.dot_dimension_numbers<[1], [0], [0], [1], [0, 0, 1, 1], [], []>} : vector<2x32xbf16>, vector<32x32xbf16>, vector<2x32xf32> -> vector<2x32xf32>
    %33 = arith.addf %32, %4 : vector<2x32xf32>
    %34 = arith.index_cast %c2_i32 : i32 to index
    %c0_19 = arith.constant 0 : index
    %c0_20 = arith.constant 0 : index
    %35 = vector.load %arg7[%34, %c0_19, %c0_20] : memref<7x2x32xf32, #tpu.memory_space<vmem>>, vector<1x2x32xf32>
    %36 = vector.shape_cast %35 : vector<1x2x32xf32> to vector<2x32xf32>
    %37 = vector.shape_cast %33 : vector<2x32xf32> to vector<1x2x32xf32>
    tpu.vector_store %arg7[%34, %c0_19, %c0_20], %37 {strides = array<i32>} : memref<7x2x32xf32, #tpu.memory_space<vmem>>, vector<1x2x32xf32>,
    %c3_i32 = arith.constant 3 : i32
    %38 = arith.index_cast %c3_i32 : i32 to index
    %c0_21 = arith.constant 0 : index
    %c0_22 = arith.constant 0 : index
    %39 = vector.load %arg1[%38, %c0_21, %c0_22] : memref<7x2x32xf32, #tpu.memory_space<vmem>>, vector<1x2x32xf32>
    %40 = vector.shape_cast %39 : vector<1x2x32xf32> to vector<2x32xf32>
    %41 = arith.truncf %40 : vector<2x32xf32> to vector<2x32xbf16>
    %cst_23 = arith.constant dense<0.000000e+00> : vector<2x32xf32>
    %42 = tpu.matmul %41, %0, %cst_23 {dimension_numbers = #tpu.dot_dimension_numbers<[1], [0], [0], [1], [0, 0, 1, 1], [], []>} : vector<2x32xbf16>, vector<32x32xbf16>, vector<2x32xf32> -> vector<2x32xf32>
    %43 = arith.addf %42, %4 : vector<2x32xf32>
    %44 = arith.index_cast %c3_i32 : i32 to index
    %c0_24 = arith.constant 0 : index
    %c0_25 = arith.constant 0 : index
    %45 = vector.load %arg7[%44, %c0_24, %c0_25] : memref<7x2x32xf32, #tpu.memory_space<vmem>>, vector<1x2x32xf32>
    %46 = vector.shape_cast %45 : vector<1x2x32xf32> to vector<2x32xf32>
    %47 = vector.shape_cast %43 : vector<2x32xf32> to vector<1x2x32xf32>
    tpu.vector_store %arg7[%44, %c0_24, %c0_25], %47 {strides = array<i32>} : memref<7x2x32xf32, #tpu.memory_space<vmem>>, vector<1x2x32xf32>,
    %c4_i32 = arith.constant 4 : i32
    %48 = arith.index_cast %c4_i32 : i32 to index
    %c0_26 = arith.constant 0 : index
    %c0_27 = arith.constant 0 : index
    %49 = vector.load %arg1[%48, %c0_26, %c0_27] : memref<7x2x32xf32, #tpu.memory_space<vmem>>, vector<1x2x32xf32>
    %50 = vector.shape_cast %49 : vector<1x2x32xf32> to vector<2x32xf32>
    %51 = arith.truncf %50 : vector<2x32xf32> to vector<2x32xbf16>
    %cst_28 = arith.constant dense<0.000000e+00> : vector<2x32xf32>
    %52 = tpu.matmul %51, %0, %cst_28 {dimension_numbers = #tpu.dot_dimension_numbers<[1], [0], [0], [1], [0, 0, 1, 1], [], []>} : vector<2x32xbf16>, vector<32x32xbf16>, vector<2x32xf32> -> vector<2x32xf32>
    %53 = arith.addf %52, %4 : vector<2x32xf32>
    %54 = arith.index_cast %c4_i32 : i32 to index
    %c0_29 = arith.constant 0 : index
    %c0_30 = arith.constant 0 : index
    %55 = vector.load %arg7[%54, %c0_29, %c0_30] : memref<7x2x32xf32, #tpu.memory_space<vmem>>, vector<1x2x32xf32>
    %56 = vector.shape_cast %55 : vector<1x2x32xf32> to vector<2x32xf32>
    %57 = vector.shape_cast %53 : vector<2x32xf32> to vector<1x2x32xf32>
    tpu.vector_store %arg7[%54, %c0_29, %c0_30], %57 {strides = array<i32>} : memref<7x2x32xf32, #tpu.memory_space<vmem>>, vector<1x2x32xf32>,
    %c5_i32 = arith.constant 5 : i32
    %58 = arith.index_cast %c5_i32 : i32 to index
    %c0_31 = arith.constant 0 : index
    %c0_32 = arith.constant 0 : index
    %59 = vector.load %arg1[%58, %c0_31, %c0_32] : memref<7x2x32xf32, #tpu.memory_space<vmem>>, vector<1x2x32xf32>
    %60 = vector.shape_cast %59 : vector<1x2x32xf32> to vector<2x32xf32>
    %61 = arith.truncf %60 : vector<2x32xf32> to vector<2x32xbf16>
    %cst_33 = arith.constant dense<0.000000e+00> : vector<2x32xf32>
    %62 = tpu.matmul %61, %0, %cst_33 {dimension_numbers = #tpu.dot_dimension_numbers<[1], [0], [0], [1], [0, 0, 1, 1], [], []>} : vector<2x32xbf16>, vector<32x32xbf16>, vector<2x32xf32> -> vector<2x32xf32>
    %63 = arith.addf %62, %4 : vector<2x32xf32>
    %64 = arith.index_cast %c5_i32 : i32 to index
    %c0_34 = arith.constant 0 : index
    %c0_35 = arith.constant 0 : index
    %65 = vector.load %arg7[%64, %c0_34, %c0_35] : memref<7x2x32xf32, #tpu.memory_space<vmem>>, vector<1x2x32xf32>
    %66 = vector.shape_cast %65 : vector<1x2x32xf32> to vector<2x32xf32>
    %67 = vector.shape_cast %63 : vector<2x32xf32> to vector<1x2x32xf32>
    tpu.vector_store %arg7[%64, %c0_34, %c0_35], %67 {strides = array<i32>} : memref<7x2x32xf32, #tpu.memory_space<vmem>>, vector<1x2x32xf32>,
    %c6_i32 = arith.constant 6 : i32
    %68 = arith.index_cast %c6_i32 : i32 to index
    %c0_36 = arith.constant 0 : index
    %c0_37 = arith.constant 0 : index
    %69 = vector.load %arg1[%68, %c0_36, %c0_37] : memref<7x2x32xf32, #tpu.memory_space<vmem>>, vector<1x2x32xf32>
    %70 = vector.shape_cast %69 : vector<1x2x32xf32> to vector<2x32xf32>
    %71 = arith.truncf %70 : vector<2x32xf32> to vector<2x32xbf16>
    %cst_38 = arith.constant dense<0.000000e+00> : vector<2x32xf32>
    %72 = tpu.matmul %71, %0, %cst_38 {dimension_numbers = #tpu.dot_dimension_numbers<[1], [0], [0], [1], [0, 0, 1, 1], [], []>} : vector<2x32xbf16>, vector<32x32xbf16>, vector<2x32xf32> -> vector<2x32xf32>
    %73 = arith.addf %72, %4 : vector<2x32xf32>
    %74 = arith.index_cast %c6_i32 : i32 to index
    %c0_39 = arith.constant 0 : index
    %c0_40 = arith.constant 0 : index
    %75 = vector.load %arg7[%74, %c0_39, %c0_40] : memref<7x2x32xf32, #tpu.memory_space<vmem>>, vector<1x2x32xf32>
    %76 = vector.shape_cast %75 : vector<1x2x32xf32> to vector<2x32xf32>
    %77 = vector.shape_cast %73 : vector<2x32xf32> to vector<1x2x32xf32>
    tpu.vector_store %arg7[%74, %c0_39, %c0_40], %77 {strides = array<i32>} : memref<7x2x32xf32, #tpu.memory_space<vmem>>, vector<1x2x32xf32>,
    %c7_i32 = arith.constant 7 : i32
    %c0_41 = arith.constant 0 : index
    %c0_42 = arith.constant 0 : index
    %78 = vector.load %arg6[%c0_41, %c0_42] : memref<2x32xf32, #tpu.memory_space<vmem>>, vector<2x32xf32>
    %c0_i32_43 = arith.constant 0 : i32
    %79 = arith.index_cast %c0_i32_43 : i32 to index
    %c0_44 = arith.constant 0 : index
    %c0_45 = arith.constant 0 : index
    %80 = vector.load %arg7[%79, %c0_44, %c0_45] : memref<7x2x32xf32, #tpu.memory_space<vmem>>, vector<1x2x32xf32>
    %81 = vector.shape_cast %80 : vector<1x2x32xf32> to vector<2x32xf32>
    %82 = arith.truncf %78 : vector<2x32xf32> to vector<2x32xbf16>
    %cst_46 = arith.constant dense<0.000000e+00> : vector<2x32xf32>
    %83 = tpu.matmul %82, %1, %cst_46 {dimension_numbers = #tpu.dot_dimension_numbers<[1], [0], [0], [1], [0, 0, 1, 1], [], []>} : vector<2x32xbf16>, vector<32x32xbf16>, vector<2x32xf32> -> vector<2x32xf32>
    %84 = arith.addf %81, %83 : vector<2x32xf32>
    %85 = math.tanh %84 : vector<2x32xf32>
    %86 = arith.index_cast %c0_i32_43 : i32 to index
    %c0_47 = arith.constant 0 : index
    %c0_48 = arith.constant 0 : index
    %87 = vector.load %arg5[%86, %c0_47, %c0_48] : memref<7x2x32xf32, #tpu.memory_space<vmem>>, vector<1x2x32xf32>
    %88 = vector.shape_cast %87 : vector<1x2x32xf32> to vector<2x32xf32>
    %89 = vector.shape_cast %85 : vector<2x32xf32> to vector<1x2x32xf32>
    tpu.vector_store %arg5[%86, %c0_47, %c0_48], %89 {strides = array<i32>} : memref<7x2x32xf32, #tpu.memory_space<vmem>>, vector<1x2x32xf32>,
    %c1_i32_49 = arith.constant 1 : i32
    %90 = arith.index_cast %c1_i32_49 : i32 to index
    %c0_50 = arith.constant 0 : index
    %c0_51 = arith.constant 0 : index
    %91 = vector.load %arg7[%90, %c0_50, %c0_51] : memref<7x2x32xf32, #tpu.memory_space<vmem>>, vector<1x2x32xf32>
    %92 = vector.shape_cast %91 : vector<1x2x32xf32> to vector<2x32xf32>
    %93 = arith.truncf %85 : vector<2x32xf32> to vector<2x32xbf16>
    %cst_52 = arith.constant dense<0.000000e+00> : vector<2x32xf32>
    %94 = tpu.matmul %93, %1, %cst_52 {dimension_numbers = #tpu.dot_dimension_numbers<[1], [0], [0], [1], [0, 0, 1, 1], [], []>} : vector<2x32xbf16>, vector<32x32xbf16>, vector<2x32xf32> -> vector<2x32xf32>
    %95 = arith.addf %92, %94 : vector<2x32xf32>
    %96 = math.tanh %95 : vector<2x32xf32>
    %97 = arith.index_cast %c1_i32_49 : i32 to index
    %c0_53 = arith.constant 0 : index
    %c0_54 = arith.constant 0 : index
    %98 = vector.load %arg5[%97, %c0_53, %c0_54] : memref<7x2x32xf32, #tpu.memory_space<vmem>>, vector<1x2x32xf32>
    %99 = vector.shape_cast %98 : vector<1x2x32xf32> to vector<2x32xf32>
    %100 = vector.shape_cast %96 : vector<2x32xf32> to vector<1x2x32xf32>
    tpu.vector_store %arg5[%97, %c0_53, %c0_54], %100 {strides = array<i32>} : memref<7x2x32xf32, #tpu.memory_space<vmem>>, vector<1x2x32xf32>,
    %c2_i32_55 = arith.constant 2 : i32
    %101 = arith.index_cast %c2_i32_55 : i32 to index
    %c0_56 = arith.constant 0 : index
    %c0_57 = arith.constant 0 : index
    %102 = vector.load %arg7[%101, %c0_56, %c0_57] : memref<7x2x32xf32, #tpu.memory_space<vmem>>, vector<1x2x32xf32>
    %103 = vector.shape_cast %102 : vector<1x2x32xf32> to vector<2x32xf32>
    %104 = arith.truncf %96 : vector<2x32xf32> to vector<2x32xbf16>
    %cst_58 = arith.constant dense<0.000000e+00> : vector<2x32xf32>
    %105 = tpu.matmul %104, %1, %cst_58 {dimension_numbers = #tpu.dot_dimension_numbers<[1], [0], [0], [1], [0, 0, 1, 1], [], []>} : vector<2x32xbf16>, vector<32x32xbf16>, vector<2x32xf32> -> vector<2x32xf32>
    %106 = arith.addf %103, %105 : vector<2x32xf32>
    %107 = math.tanh %106 : vector<2x32xf32>
    %108 = arith.index_cast %c2_i32_55 : i32 to index
    %c0_59 = arith.constant 0 : index
    %c0_60 = arith.constant 0 : index
    %109 = vector.load %arg5[%108, %c0_59, %c0_60] : memref<7x2x32xf32, #tpu.memory_space<vmem>>, vector<1x2x32xf32>
    %110 = vector.shape_cast %109 : vector<1x2x32xf32> to vector<2x32xf32>
    %111 = vector.shape_cast %107 : vector<2x32xf32> to vector<1x2x32xf32>
    tpu.vector_store %arg5[%108, %c0_59, %c0_60], %111 {strides = array<i32>} : memref<7x2x32xf32, #tpu.memory_space<vmem>>, vector<1x2x32xf32>,
    %c3_i32_61 = arith.constant 3 : i32
    %112 = arith.index_cast %c3_i32_61 : i32 to index
    %c0_62 = arith.constant 0 : index
    %c0_63 = arith.constant 0 : index
    %113 = vector.load %arg7[%112, %c0_62, %c0_63] : memref<7x2x32xf32, #tpu.memory_space<vmem>>, vector<1x2x32xf32>
    %114 = vector.shape_cast %113 : vector<1x2x32xf32> to vector<2x32xf32>
    %115 = arith.truncf %107 : vector<2x32xf32> to vector<2x32xbf16>
    %cst_64 = arith.constant dense<0.000000e+00> : vector<2x32xf32>
    %116 = tpu.matmul %115, %1, %cst_64 {dimension_numbers = #tpu.dot_dimension_numbers<[1], [0], [0], [1], [0, 0, 1, 1], [], []>} : vector<2x32xbf16>, vector<32x32xbf16>, vector<2x32xf32> -> vector<2x32xf32>
    %117 = arith.addf %114, %116 : vector<2x32xf32>
    %118 = math.tanh %117 : vector<2x32xf32>
    %119 = arith.index_cast %c3_i32_61 : i32 to index
    %c0_65 = arith.constant 0 : index
    %c0_66 = arith.constant 0 : index
    %120 = vector.load %arg5[%119, %c0_65, %c0_66] : memref<7x2x32xf32, #tpu.memory_space<vmem>>, vector<1x2x32xf32>
    %121 = vector.shape_cast %120 : vector<1x2x32xf32> to vector<2x32xf32>
    %122 = vector.shape_cast %118 : vector<2x32xf32> to vector<1x2x32xf32>
    tpu.vector_store %arg5[%119, %c0_65, %c0_66], %122 {strides = array<i32>} : memref<7x2x32xf32, #tpu.memory_space<vmem>>, vector<1x2x32xf32>,
    %c4_i32_67 = arith.constant 4 : i32
    %123 = arith.index_cast %c4_i32_67 : i32 to index
    %c0_68 = arith.constant 0 : index
    %c0_69 = arith.constant 0 : index
    %124 = vector.load %arg7[%123, %c0_68, %c0_69] : memref<7x2x32xf32, #tpu.memory_space<vmem>>, vector<1x2x32xf32>
    %125 = vector.shape_cast %124 : vector<1x2x32xf32> to vector<2x32xf32>
    %126 = arith.truncf %118 : vector<2x32xf32> to vector<2x32xbf16>
    %cst_70 = arith.constant dense<0.000000e+00> : vector<2x32xf32>
    %127 = tpu.matmul %126, %1, %cst_70 {dimension_numbers = #tpu.dot_dimension_numbers<[1], [0], [0], [1], [0, 0, 1, 1], [], []>} : vector<2x32xbf16>, vector<32x32xbf16>, vector<2x32xf32> -> vector<2x32xf32>
    %128 = arith.addf %125, %127 : vector<2x32xf32>
    %129 = math.tanh %128 : vector<2x32xf32>
    %130 = arith.index_cast %c4_i32_67 : i32 to index
    %c0_71 = arith.constant 0 : index
    %c0_72 = arith.constant 0 : index
    %131 = vector.load %arg5[%130, %c0_71, %c0_72] : memref<7x2x32xf32, #tpu.memory_space<vmem>>, vector<1x2x32xf32>
    %132 = vector.shape_cast %131 : vector<1x2x32xf32> to vector<2x32xf32>
    %133 = vector.shape_cast %129 : vector<2x32xf32> to vector<1x2x32xf32>
    tpu.vector_store %arg5[%130, %c0_71, %c0_72], %133 {strides = array<i32>} : memref<7x2x32xf32, #tpu.memory_space<vmem>>, vector<1x2x32xf32>,
    %c5_i32_73 = arith.constant 5 : i32
    %134 = arith.index_cast %c5_i32_73 : i32 to index
    %c0_74 = arith.constant 0 : index
    %c0_75 = arith.constant 0 : index
    %135 = vector.load %arg7[%134, %c0_74, %c0_75] : memref<7x2x32xf32, #tpu.memory_space<vmem>>, vector<1x2x32xf32>
    %136 = vector.shape_cast %135 : vector<1x2x32xf32> to vector<2x32xf32>
    %137 = arith.truncf %129 : vector<2x32xf32> to vector<2x32xbf16>
    %cst_76 = arith.constant dense<0.000000e+00> : vector<2x32xf32>
    %138 = tpu.matmul %137, %1, %cst_76 {dimension_numbers = #tpu.dot_dimension_numbers<[1], [0], [0], [1], [0, 0, 1, 1], [], []>} : vector<2x32xbf16>, vector<32x32xbf16>, vector<2x32xf32> -> vector<2x32xf32>
    %139 = arith.addf %136, %138 : vector<2x32xf32>
    %140 = math.tanh %139 : vector<2x32xf32>
    %141 = arith.index_cast %c5_i32_73 : i32 to index
    %c0_77 = arith.constant 0 : index
    %c0_78 = arith.constant 0 : index
    %142 = vector.load %arg5[%141, %c0_77, %c0_78] : memref<7x2x32xf32, #tpu.memory_space<vmem>>, vector<1x2x32xf32>
    %143 = vector.shape_cast %142 : vector<1x2x32xf32> to vector<2x32xf32>
    %144 = vector.shape_cast %140 : vector<2x32xf32> to vector<1x2x32xf32>
    tpu.vector_store %arg5[%141, %c0_77, %c0_78], %144 {strides = array<i32>} : memref<7x2x32xf32, #tpu.memory_space<vmem>>, vector<1x2x32xf32>,
    %c6_i32_79 = arith.constant 6 : i32
    %145 = arith.index_cast %c6_i32_79 : i32 to index
    %c0_80 = arith.constant 0 : index
    %c0_81 = arith.constant 0 : index
    %146 = vector.load %arg7[%145, %c0_80, %c0_81] : memref<7x2x32xf32, #tpu.memory_space<vmem>>, vector<1x2x32xf32>
    %147 = vector.shape_cast %146 : vector<1x2x32xf32> to vector<2x32xf32>
    %148 = arith.truncf %140 : vector<2x32xf32> to vector<2x32xbf16>
    %cst_82 = arith.constant dense<0.000000e+00> : vector<2x32xf32>
    %149 = tpu.matmul %148, %1, %cst_82 {dimension_numbers = #tpu.dot_dimension_numbers<[1], [0], [0], [1], [0, 0, 1, 1], [], []>} : vector<2x32xbf16>, vector<32x32xbf16>, vector<2x32xf32> -> vector<2x32xf32>
    %150 = arith.addf %147, %149 : vector<2x32xf32>
    %151 = math.tanh %150 : vector<2x32xf32>
    %152 = arith.index_cast %c6_i32_79 : i32 to index
    %c0_83 = arith.constant 0 : index
    %c0_84 = arith.constant 0 : index
    %153 = vector.load %arg5[%152, %c0_83, %c0_84] : memref<7x2x32xf32, #tpu.memory_space<vmem>>, vector<1x2x32xf32>
    %154 = vector.shape_cast %153 : vector<1x2x32xf32> to vector<2x32xf32>
    %155 = vector.shape_cast %151 : vector<2x32xf32> to vector<1x2x32xf32>
    tpu.vector_store %arg5[%152, %c0_83, %c0_84], %155 {strides = array<i32>} : memref<7x2x32xf32, #tpu.memory_space<vmem>>, vector<1x2x32xf32>,
    %c7_i32_85 = arith.constant 7 : i32
    %c0_86 = arith.constant 0 : index
    %c0_87 = arith.constant 0 : index
    %156 = vector.load %arg6[%c0_86, %c0_87] : memref<2x32xf32, #tpu.memory_space<vmem>>, vector<2x32xf32>
    tpu.vector_store %arg6[%c0_86, %c0_87], %151 {strides = array<i32>} : memref<2x32xf32, #tpu.memory_space<vmem>>, vector<2x32xf32>,
    return
  }
  func.func @transform_0(%arg0: i32) -> (i32, i32, i32) {
    %c0_i32 = arith.constant 0 : i32
    %c0_i32_0 = arith.constant 0 : i32
    %c0_i32_1 = arith.constant 0 : i32
    return %arg0, %c0_i32, %c0_i32_0 : i32, i32, i32
  }
  func.func @transform_1(%arg0: i32) -> (i32, i32) {
    %c0_i32 = arith.constant 0 : i32
    %c0_i32_0 = arith.constant 0 : i32
    %c0_i32_1 = arith.constant 0 : i32
    return %c0_i32, %c0_i32_0 : i32, i32
  }
  func.func @transform_2(%arg0: i32) -> (i32, i32) {
    %c0_i32 = arith.constant 0 : i32
    %c0_i32_0 = arith.constant 0 : i32
    %c0_i32_1 = arith.constant 0 : i32
    return %c0_i32, %c0_i32_0 : i32, i32
  }
  func.func @transform_3(%arg0: i32) -> (i32, i32) {
    %c0_i32 = arith.constant 0 : i32
    %c0_i32_0 = arith.constant 0 : i32
    %c0_i32_1 = arith.constant 0 : i32
    return %c0_i32, %c0_i32_0 : i32, i32
  }
  func.func @transform_4(%arg0: i32) -> (i32, i32, i32) {
    %c0_i32 = arith.constant 0 : i32
    %c0_i32_0 = arith.constant 0 : i32
    %c0_i32_1 = arith.constant 0 : i32
    return %arg0, %c0_i32, %c0_i32_0 : i32, i32, i32
  }
}

</mosaic_0001>

<llo_original>
// kernel: tpu_custom_call.1
$region0: #{tpu_custom_call.1}
  #allocation0 [shape = 'u32[]', space=smem, size = 0x4, offset = 0x4, fixed_abs, tag = 'smem constant byte address 0x4 - core index']
  #allocation1 [shape = 'u32[72,128]{1,0:T(1,128)}', space=vmem, size = 0x9000, scoped, tag = 'internal scratch']
  #allocation2 [shape = 'f32[2,32]{1,0:T(2,128)}', space=vmem, size = 0x400, scoped, tag = 'scratch operand']
  #allocation3 [shape = 'f32[7,2,32]{2,1,0:T(2,128)}', space=vmem, size = 0x1c00, scoped, tag = 'scratch operand']
  %s0 = inlined_call_operand.hbm [shape: f32[7,2,32], index: 0, kind: input, shape index: {}]
  %s1 = inlined_call_operand.hbm [shape: bf16[32,32], index: 1, kind: input, shape index: {}]
  %s2 = inlined_call_operand.hbm [shape: bf16[32,32], index: 2, kind: input, shape index: {}]
  %s3 = inlined_call_operand.vmem [shape: f32[1,32], index: 3, kind: input, shape index: {}]
  %s4 = inlined_call_operand.hbm [shape: f32[7,2,32], index: 4, kind: output, shape index: {}]
  %s5 = sld [smem:[#allocation0]]
  $region42: #{tpu_custom_call.1} parent=0
    _
  %s7 = ssub.s32 1, %s5
  %s8 = scalar_select 0, %s7, %s5
  $region1: #{tpu_custom_call.1} parent=0
    #allocation4 [shape = 'u8[7168]{0}', space=vmem, size = 0x1c00, scoped, tag = 'input window, operand 0, single buffered']
    #allocation5 [shape = 's32[1]{0}', space=sflag, size = 0x4, scoped, tag = 'scoped memory for tpu_custom_call.1']
    #allocation6 [shape = 's32[1]{0}', space=sflag, size = 0x4, scoped, tag = 'scoped memory for tpu_custom_call.1']
    #allocation7 [shape = 'u8[8192]{0}', space=vmem, size = 0x2000, scoped, tag = 'input window, operand 1, single buffered']
    #allocation8 [shape = 's32[1]{0}', space=sflag, size = 0x4, scoped, tag = 'scoped memory for tpu_custom_call.1']
    #allocation9 [shape = 'u8[8192]{0}', space=vmem, size = 0x2000, scoped, tag = 'input window, operand 2, single buffered']
    #allocation10 [shape = 'u8[7168]{0}', space=vmem, size = 0x1c00, scoped, tag = 'output window, operand 0, single buffered']
    %9 = vsyncpa [#allocation5], 0
    %10 = vsyncpa [#allocation8], 0
    %11 = vsyncpa [#allocation6], 0
    // Predicated region
    $region2: #{tpu_custom_call.1} parent=1 // pred_check
      _
    $region3: #{tpu_custom_call.1} parent=1 // pred_check_branch
      %13 = sbr.rel (0) target = $region5
    $region4: #{tpu_custom_call.1} parent=1 // pred_region
      %15 = vsyncadd [#allocation5], 0
      %s16 = sshll.u32 %s0, 4
      %s17 = int_to_ptr.hbm [resolvable:$true] %s16
      %s18 = sshll.u32 [#allocation4], 4
      %s19 = int_to_ptr.vmem [resolvable:$true] %s18
      %24 = dma.hbm_to_vmem [thread:$0]  %s17, 224, %s19, [#allocation5], 32, 32, 2
    $region5: #{tpu_custom_call.1} parent=1 // pred_fallthru
      _
    // Predicated region
    $region6: #{tpu_custom_call.1} parent=1 // pred_check
      _
    $region7: #{tpu_custom_call.1} parent=1 // pred_check_branch
      %26 = sbr.rel (0) target = $region9
    $region8: #{tpu_custom_call.1} parent=1 // pred_region
      %28 = vsyncadd [#allocation8], 0
      %s29 = sshll.u32 %s1, 4
      %s30 = int_to_ptr.hbm [resolvable:$true] %s29
      %s31 = sshll.u32 [#allocation7], 4
      %s32 = int_to_ptr.vmem [resolvable:$true] %s31
      %37 = dma.hbm_to_vmem [thread:$0]  %s30, 256, %s32, [#allocation8], 64, 64, 4
    $region9: #{tpu_custom_call.1} parent=1 // pred_fallthru
      _
    // Predicated region
    $region10: #{tpu_custom_call.1} parent=1 // pred_check
      _
    $region11: #{tpu_custom_call.1} parent=1 // pred_check_branch
      %39 = sbr.rel (0) target = $region13
    $region12: #{tpu_custom_call.1} parent=1 // pred_region
      %41 = vsyncadd [#allocation8], 0
      %s42 = sshll.u32 %s2, 4
      %s43 = int_to_ptr.hbm [resolvable:$true] %s42
      %s44 = sshll.u32 [#allocation9], 4
      %s45 = int_to_ptr.vmem [resolvable:$true] %s44
      %50 = dma.hbm_to_vmem [thread:$0]  %s43, 256, %s45, [#allocation8], 64, 64, 4
    $region13: #{tpu_custom_call.1} parent=1 // pred_fallthru
      _
    // Predicated region
    $region14: #{tpu_custom_call.1} parent=1 // pred_check
      _
    $region15: #{tpu_custom_call.1} parent=1 // pred_check_branch
      %52 = sbr.rel (0) target = $region17
    $region16: #{tpu_custom_call.1} parent=1 // pred_region
      _
    $region17: #{tpu_custom_call.1} parent=1 // pred_fallthru
      _
    // Predicated region
    $region18: #{tpu_custom_call.1} parent=1 // pred_check
      _
    $region19: #{tpu_custom_call.1} parent=1 // pred_check_branch
      %54 = sbr.rel (0) target = $region21
    $region20: #{tpu_custom_call.1} parent=1 // pred_region
      %56 = dma.done [#allocation5], 224
    $region21: #{tpu_custom_call.1} parent=1 // pred_fallthru
      _
    // Predicated region
    $region22: #{tpu_custom_call.1} parent=1 // pred_check
      _
    $region23: #{tpu_custom_call.1} parent=1 // pred_check_branch
      %58 = sbr.rel (0) target = $region25
    $region24: #{tpu_custom_call.1} parent=1 // pred_region
      %60 = dma.done [#allocation8], 256
    $region25: #{tpu_custom_call.1} parent=1 // pred_fallthru
      _
    // Predicated region
    $region26: #{tpu_custom_call.1} parent=1 // pred_check
      _
    $region27: #{tpu_custom_call.1} parent=1 // pred_check_branch
      %62 = sbr.rel (0) target = $region29
    $region28: #{tpu_custom_call.1} parent=1 // pred_region
      %64 = dma.done [#allocation8], 256
    $region29: #{tpu_custom_call.1} parent=1 // pred_fallthru
      _
    %v66 = vld [vmem:[#allocation7] sm:$0xf]
    %v67 = vld [vmem:[#allocation7 + $0x4] sm:$0xf]
    %v68 = vld [vmem:[#allocation7 + $0x8] sm:$0xf]
    %v69 = vld [vmem:[#allocation7 + $0xc] sm:$0xf]
    %v70 = vld [vmem:[#allocation9] sm:$0xf]
    %v71 = vld [vmem:[#allocation9 + $0x4] sm:$0xf]
    %v72 = vld [vmem:[#allocation9 + $0x8] sm:$0xf]
    %v73 = vld [vmem:[#allocation9 + $0xc] sm:$0xf]
    %v74 = vld [vmem:[%s3] sm:$0x1]
    %v76 = vperm.slane %v74, 0
    %p78 = scmp.eq.s32.totalorder 0, 0
    // Predicated region
    $region30: #{tpu_custom_call.1} parent=1 // pred_check
      %p79 = pneg %p78
    $region31: #{tpu_custom_call.1} parent=1 // pred_check_branch
      %81 = sbr.rel (%p79) target = $region33
    $region32: #{tpu_custom_call.1} parent=1 // pred_region
      %vm82 = vcmask 254976
      %83 = vst.msk [vmem:[#allocation2] sm:$0x3] %vm82, 0.0
    $region33: #{tpu_custom_call.1} parent=1 // pred_fallthru
      _
    %v84 = vld [vmem:[#allocation4] sm:$0x3]
    %v85 = vpack.c.bf16 %v84, %v84
    %v90 = vunpack.c.l.b16 %v66
    %v91 = vunpack.c.l.b16 %v67
    %v92 = vunpack.c.l.b16 %v68
    %v93 = vunpack.c.l.b16 %v69
    %v94 = vpack.c.b16 %v91, %v90
    %v95 = vpack.c.b16 %v93, %v92
    %vm98 = vcmask 261120
    %v100 = vsel %vm98, %v85, 0
    %102 = vmatpush.bf16.msra.mxu0 0
    %103 = vmatpush.bf16.msra.mxu0 0
    %104 = vmatpush.bf16.msra.mxu0 0
    %105 = vmatpush.bf16.msra.mxu0 0
    %106 = vmatpush.bf16.msra.mxu0 0
    %107 = vmatpush.bf16.msra.mxu0 0
    %108 = vmatpush.bf16.msra.mxu0 %v95
    %109 = vmatpush.bf16.msra.mxu0 %v94
    %110 = vmatmul.bf16.gmra.mxu0 %v100
    %v111 = vpop.f32.mrf.mxu0
    %v112 = vadd.f32 %v76, %v111
    %v113 = vpop.f32.mrf.mxu0
    %114 = vdwg.mxu0
    %vm115 = vcmask 254976
    %116 = vst.msk [vmem:[#allocation3] sm:$0x3] %vm115, %v112
    %s117 = scalar_lea.vmem [#allocation4], 2
    %v118 = vld [vmem:[%s117] sm:$0x3]
    %v119 = vpack.c.bf16 %v118, %v118
    %v121 = vsel %vm98, %v119, 0
    %123 = vmatpush.bf16.msra.mxu0 0
    %124 = vmatpush.bf16.msra.mxu0 0
    %125 = vmatpush.bf16.msra.mxu0 0
    %126 = vmatpush.bf16.msra.mxu0 0
    %127 = vmatpush.bf16.msra.mxu0 0
    %128 = vmatpush.bf16.msra.mxu0 0
    %129 = vmatpush.bf16.msra.mxu0 %v95
    %130 = vmatpush.bf16.msra.mxu0 %v94
    %131 = vmatmul.bf16.gmra.mxu0 %v121
    %v132 = vpop.f32.mrf.mxu0
    %v133 = vadd.f32 %v76, %v132
    %v134 = vpop.f32.mrf.mxu0
    %135 = vdwg.mxu0
    %s136 = scalar_lea.vmem [#allocation3], 2
    %137 = vst.msk [vmem:[%s136] sm:$0x3] %vm115, %v133
    %s138 = scalar_lea.vmem [#allocation4], 4
    %v139 = vld [vmem:[%s138] sm:$0x3]
    %v140 = vpack.c.bf16 %v139, %v139
    %v142 = vsel %vm98, %v140, 0
    %144 = vmatpush.bf16.msra.mxu0 0
    %145 = vmatpush.bf16.msra.mxu0 0
    %146 = vmatpush.bf16.msra.mxu0 0
    %147 = vmatpush.bf16.msra.mxu0 0
    %148 = vmatpush.bf16.msra.mxu0 0
    %149 = vmatpush.bf16.msra.mxu0 0
    %150 = vmatpush.bf16.msra.mxu0 %v95
    %151 = vmatpush.bf16.msra.mxu0 %v94
    %152 = vmatmul.bf16.gmra.mxu0 %v142
    %v153 = vpop.f32.mrf.mxu0
    %v154 = vadd.f32 %v76, %v153
    %v155 = vpop.f32.mrf.mxu0
    %156 = vdwg.mxu0
    %s157 = scalar_lea.vmem [#allocation3], 4
    %158 = vst.msk [vmem:[%s157] sm:$0x3] %vm115, %v154
    %s159 = scalar_lea.vmem [#allocation4], 6
    %v160 = vld [vmem:[%s159] sm:$0x3]
    %v161 = vpack.c.bf16 %v160, %v160
    %v163 = vsel %vm98, %v161, 0
    %165 = vmatpush.bf16.msra.mxu0 0
    %166 = vmatpush.bf16.msra.mxu0 0
    %167 = vmatpush.bf16.msra.mxu0 0
    %168 = vmatpush.bf16.msra.mxu0 0
    %169 = vmatpush.bf16.msra.mxu0 0
    %170 = vmatpush.bf16.msra.mxu0 0
    %171 = vmatpush.bf16.msra.mxu0 %v95
    %172 = vmatpush.bf16.msra.mxu0 %v94
    %173 = vmatmul.bf16.gmra.mxu0 %v163
    %v174 = vpop.f32.mrf.mxu0
    %v175 = vadd.f32 %v76, %v174
    %v176 = vpop.f32.mrf.mxu0
    %177 = vdwg.mxu0
    %s178 = scalar_lea.vmem [#allocation3], 6
    %179 = vst.msk [vmem:[%s178] sm:$0x3] %vm115, %v175
    %s180 = scalar_lea.vmem [#allocation4], 8
    %v181 = vld [vmem:[%s180] sm:$0x3]
    %v182 = vpack.c.bf16 %v181, %v181
    %v184 = vsel %vm98, %v182, 0
    %186 = vmatpush.bf16.msra.mxu0 0
    %187 = vmatpush.bf16.msra.mxu0 0
    %188 = vmatpush.bf16.msra.mxu0 0
    %189 = vmatpush.bf16.msra.mxu0 0
    %190 = vmatpush.bf16.msra.mxu0 0
    %191 = vmatpush.bf16.msra.mxu0 0
    %192 = vmatpush.bf16.msra.mxu0 %v95
    %193 = vmatpush.bf16.msra.mxu0 %v94
    %194 = vmatmul.bf16.gmra.mxu0 %v184
    %v195 = vpop.f32.mrf.mxu0
    %v196 = vadd.f32 %v76, %v195
    %v197 = vpop.f32.mrf.mxu0
    %198 = vdwg.mxu0
    %s199 = scalar_lea.vmem [#allocation3], 8
    %200 = vst.msk [vmem:[%s199] sm:$0x3] %vm115, %v196
    %s201 = scalar_lea.vmem [#allocation4], 10
    %v202 = vld [vmem:[%s201] sm:$0x3]
    %v203 = vpack.c.bf16 %v202, %v202
    %v205 = vsel %vm98, %v203, 0
    %207 = vmatpush.bf16.msra.mxu0 0
    %208 = vmatpush.bf16.msra.mxu0 0
    %209 = vmatpush.bf16.msra.mxu0 0
    %210 = vmatpush.bf16.msra.mxu0 0
    %211 = vmatpush.bf16.msra.mxu0 0
    %212 = vmatpush.bf16.msra.mxu0 0
    %213 = vmatpush.bf16.msra.mxu0 %v95
    %214 = vmatpush.bf16.msra.mxu0 %v94
    %215 = vmatmul.bf16.gmra.mxu0 %v205
    %v216 = vpop.f32.mrf.mxu0
    %v217 = vadd.f32 %v76, %v216
    %v218 = vpop.f32.mrf.mxu0
    %219 = vdwg.mxu0
    %s220 = scalar_lea.vmem [#allocation3], 10
    %221 = vst.msk [vmem:[%s220] sm:$0x3] %vm115, %v217
    %s222 = scalar_lea.vmem [#allocation4], 12
    %v223 = vld [vmem:[%s222] sm:$0x3]
    %v224 = vpack.c.bf16 %v223, %v223
    %v226 = vsel %vm98, %v224, 0
    %228 = vmatpush.bf16.msra.mxu0 0
    %229 = vmatpush.bf16.msra.mxu0 0
    %230 = vmatpush.bf16.msra.mxu0 0
    %231 = vmatpush.bf16.msra.mxu0 0
    %232 = vmatpush.bf16.msra.mxu0 0
    %233 = vmatpush.bf16.msra.mxu0 0
    %234 = vmatpush.bf16.msra.mxu0 %v95
    %235 = vmatpush.bf16.msra.mxu0 %v94
    %236 = vmatmul.bf16.gmra.mxu0 %v226
    %v237 = vpop.f32.mrf.mxu0
    %v238 = vadd.f32 %v76, %v237
    %v239 = vpop.f32.mrf.mxu0
    %240 = vdwg.mxu0
    %s241 = scalar_lea.vmem [#allocation3], 12
    %242 = vst.msk [vmem:[%s241] sm:$0x3] %vm115, %v238
    %v243 = vld [vmem:[#allocation2] sm:$0x3]
    %v244 = vld [vmem:[#allocation3] sm:$0x3]
    %v245 = vpack.c.bf16 %v243, %v243
    %v250 = vunpack.c.l.b16 %v70
    %v251 = vunpack.c.l.b16 %v71
    %v252 = vunpack.c.l.b16 %v72
    %v253 = vunpack.c.l.b16 %v73
    %v254 = vpack.c.b16 %v251, %v250
    %v255 = vpack.c.b16 %v253, %v252
    %v259 = vsel %vm98, %v245, 0
    %261 = vmatpush.bf16.msra.mxu0 0
    %262 = vmatpush.bf16.msra.mxu0 0
    %263 = vmatpush.bf16.msra.mxu0 0
    %264 = vmatpush.bf16.msra.mxu0 0
    %265 = vmatpush.bf16.msra.mxu0 0
    %266 = vmatpush.bf16.msra.mxu0 0
    %267 = vmatpush.bf16.msra.mxu0 %v255
    %268 = vmatpush.bf16.msra.mxu0 %v254
    %269 = vmatmul.bf16.gmra.mxu0 %v259
    %v270 = vpop.f32.mrf.mxu0
    %v271 = vadd.f32 0.0, %v270
    %v272 = vpop.f32.mrf.mxu0
    %273 = vdwg.mxu0
    %v274 = vadd.f32 %v244, %v271
    %v275 = vtanh.pop %v274
    %276 = vst.msk [vmem:[#allocation10] sm:$0x3] %vm115, %v275
    %v277 = vld [vmem:[%s136] sm:$0x3]
    %v278 = vpack.c.bf16 %v275, %v275
    %v280 = vsel %vm98, %v278, 0
    %282 = vmatpush.bf16.msra.mxu0 0
    %283 = vmatpush.bf16.msra.mxu0 0
    %284 = vmatpush.bf16.msra.mxu0 0
    %285 = vmatpush.bf16.msra.mxu0 0
    %286 = vmatpush.bf16.msra.mxu0 0
    %287 = vmatpush.bf16.msra.mxu0 0
    %288 = vmatpush.bf16.msra.mxu0 %v255
    %289 = vmatpush.bf16.msra.mxu0 %v254
    %290 = vmatmul.bf16.gmra.mxu0 %v280
    %v291 = vpop.f32.mrf.mxu0
    %v292 = vadd.f32 0.0, %v291
    %v293 = vpop.f32.mrf.mxu0
    %294 = vdwg.mxu0
    %v295 = vadd.f32 %v277, %v292
    %v296 = vtanh.pop %v295
    %s297 = scalar_lea.vmem [#allocation10], 2
    %298 = vst.msk [vmem:[%s297] sm:$0x3] %vm115, %v296
    %v299 = vld [vmem:[%s157] sm:$0x3]
    %v300 = vpack.c.bf16 %v296, %v296
    %v302 = vsel %vm98, %v300, 0
    %304 = vmatpush.bf16.msra.mxu0 0
    %305 = vmatpush.bf16.msra.mxu0 0
    %306 = vmatpush.bf16.msra.mxu0 0
    %307 = vmatpush.bf16.msra.mxu0 0
    %308 = vmatpush.bf16.msra.mxu0 0
    %309 = vmatpush.bf16.msra.mxu0 0
    %310 = vmatpush.bf16.msra.mxu0 %v255
    %311 = vmatpush.bf16.msra.mxu0 %v254
    %312 = vmatmul.bf16.gmra.mxu0 %v302
    %v313 = vpop.f32.mrf.mxu0
    %v314 = vadd.f32 0.0, %v313
    %v315 = vpop.f32.mrf.mxu0
    %316 = vdwg.mxu0
    %v317 = vadd.f32 %v299, %v314
    %v318 = vtanh.pop %v317
    %s319 = scalar_lea.vmem [#allocation10], 4
    %320 = vst.msk [vmem:[%s319] sm:$0x3] %vm115, %v318
    %v321 = vld [vmem:[%s178] sm:$0x3]
    %v322 = vpack.c.bf16 %v318, %v318
    %v324 = vsel %vm98, %v322, 0
    %326 = vmatpush.bf16.msra.mxu0 0
    %327 = vmatpush.bf16.msra.mxu0 0
    %328 = vmatpush.bf16.msra.mxu0 0
    %329 = vmatpush.bf16.msra.mxu0 0
    %330 = vmatpush.bf16.msra.mxu0 0
    %331 = vmatpush.bf16.msra.mxu0 0
    %332 = vmatpush.bf16.msra.mxu0 %v255
    %333 = vmatpush.bf16.msra.mxu0 %v254
    %334 = vmatmul.bf16.gmra.mxu0 %v324
    %v335 = vpop.f32.mrf.mxu0
    %v336 = vadd.f32 0.0, %v335
    %v337 = vpop.f32.mrf.mxu0
    %338 = vdwg.mxu0
    %v339 = vadd.f32 %v321, %v336
    %v340 = vtanh.pop %v339
    %s341 = scalar_lea.vmem [#allocation10], 6
    %342 = vst.msk [vmem:[%s341] sm:$0x3] %vm115, %v340
    %v343 = vld [vmem:[%s199] sm:$0x3]
    %v344 = vpack.c.bf16 %v340, %v340
    %v346 = vsel %vm98, %v344, 0
    %348 = vmatpush.bf16.msra.mxu0 0
    %349 = vmatpush.bf16.msra.mxu0 0
    %350 = vmatpush.bf16.msra.mxu0 0
    %351 = vmatpush.bf16.msra.mxu0 0
    %352 = vmatpush.bf16.msra.mxu0 0
    %353 = vmatpush.bf16.msra.mxu0 0
    %354 = vmatpush.bf16.msra.mxu0 %v255
    %355 = vmatpush.bf16.msra.mxu0 %v254
    %356 = vmatmul.bf16.gmra.mxu0 %v346
    %v357 = vpop.f32.mrf.mxu0
    %v358 = vadd.f32 0.0, %v357
    %v359 = vpop.f32.mrf.mxu0
    %360 = vdwg.mxu0
    %v361 = vadd.f32 %v343, %v358
    %v362 = vtanh.pop %v361
    %s363 = scalar_lea.vmem [#allocation10], 8
    %364 = vst.msk [vmem:[%s363] sm:$0x3] %vm115, %v362
    %v365 = vld [vmem:[%s220] sm:$0x3]
    %v366 = vpack.c.bf16 %v362, %v362
    %v368 = vsel %vm98, %v366, 0
    %370 = vmatpush.bf16.msra.mxu0 0
    %371 = vmatpush.bf16.msra.mxu0 0
    %372 = vmatpush.bf16.msra.mxu0 0
    %373 = vmatpush.bf16.msra.mxu0 0
    %374 = vmatpush.bf16.msra.mxu0 0
    %375 = vmatpush.bf16.msra.mxu0 0
    %376 = vmatpush.bf16.msra.mxu0 %v255
    %377 = vmatpush.bf16.msra.mxu0 %v254
    %378 = vmatmul.bf16.gmra.mxu0 %v368
    %v379 = vpop.f32.mrf.mxu0
    %v380 = vadd.f32 0.0, %v379
    %v381 = vpop.f32.mrf.mxu0
    %382 = vdwg.mxu0
    %v383 = vadd.f32 %v365, %v380
    %v384 = vtanh.pop %v383
    %s385 = scalar_lea.vmem [#allocation10], 10
    %386 = vst.msk [vmem:[%s385] sm:$0x3] %vm115, %v384
    %v387 = vld [vmem:[%s241] sm:$0x3]
    %v388 = vpack.c.bf16 %v384, %v384
    %v390 = vsel %vm98, %v388, 0
    %392 = vmatpush.bf16.msra.mxu0 0
    %393 = vmatpush.bf16.msra.mxu0 0
    %394 = vmatpush.bf16.msra.mxu0 0
    %395 = vmatpush.bf16.msra.mxu0 0
    %396 = vmatpush.bf16.msra.mxu0 0
    %397 = vmatpush.bf16.msra.mxu0 0
    %398 = vmatpush.bf16.msra.mxu0 %v255
    %399 = vmatpush.bf16.msra.mxu0 %v254
    %400 = vmatmul.bf16.gmra.mxu0 %v390
    %v401 = vpop.f32.mrf.mxu0
    %v402 = vadd.f32 0.0, %v401
    %v403 = vpop.f32.mrf.mxu0
    %404 = vdwg.mxu0
    %v405 = vadd.f32 %v387, %v402
    %v406 = vtanh.pop %v405
    %s407 = scalar_lea.vmem [#allocation10], 12
    %408 = vst.msk [vmem:[%s407] sm:$0x3] %vm115, %v406
    %409 = vst.msk [vmem:[#allocation2] sm:$0x3] %vm115, %v406
    // Predicated region
    $region34: #{tpu_custom_call.1} parent=1 // pred_check
      _
    $region35: #{tpu_custom_call.1} parent=1 // pred_check_branch
      %411 = sbr.rel (0) target = $region37
    $region36: #{tpu_custom_call.1} parent=1 // pred_region
      %413 = vsyncadd [#allocation6], 0
      %s414 = sshll.u32 [#allocation10], 4
      %s415 = int_to_ptr.vmem [resolvable:$true] %s414
      %s416 = sshll.u32 %s4, 4
      %s417 = int_to_ptr.hbm [resolvable:$true] %s416
      %422 = dma.vmem_to_hbm [thread:$0]  %s415, 224, %s417, [#allocation6], 32, 32, 2
    $region37: #{tpu_custom_call.1} parent=1 // pred_fallthru
      _
    // Predicated region
    $region38: #{tpu_custom_call.1} parent=1 // pred_check
      _
    $region39: #{tpu_custom_call.1} parent=1 // pred_check_branch
      %424 = sbr.rel (0) target = $region41
    $region40: #{tpu_custom_call.1} parent=1 // pred_region
      %426 = dma.done [#allocation6], 224
    $region41: #{tpu_custom_call.1} parent=1 // pred_fallthru
      _
    %427 = vsyncpa [#allocation5], 1
    %428 = vsyncpa [#allocation8], 1
    %429 = vsyncpa [#allocation6], 1

</llo_original>
